<compile_context>
chip_gen: v7x
topology: tpu7x:2x2x1
jax: 0.10.0
libtpu: 0.0.40
codegen_flags: <defaults>
</compile_context>

<pallas_src>
import jax
import jax.numpy as jnp
from jax.experimental import pallas as pl
from jax.experimental.pallas import tpu as pltpu


# Target rows per batch tile (lane axis). Multiple of 128. With lane-dense
# (E, TB)/(H, TB) f32 tiles the per-tile VMEM footprint (buffers + in-kernel
# temporaries) stays around ~1 MiB at TB=4096 -- comfortably inside v7x's
# smaller VMEM as well as v5e/v6e.
_TB_TARGET = 4096


def _round_up(x, m):
    return ((x + m - 1) // m) * m


# ----------------------------------------------------------------------------
# Kernels
# ----------------------------------------------------------------------------
def _fused_gather_kernel(uid_ref, aid_ref, utab_ref, atab_ref,
                         w1u_ref, w1a_ref, b1_ref, w2_ref, b2_ref, out_ref):
    """Embedding gather + fc1 + ReLU + fc2 for one batch tile (batch on lanes).

    uid_ref / aid_ref : (1, TB)   int32 ids (streamed)
    utab_ref          : (E, NU)   user embedding table, transposed (resident)
    atab_ref          : (E, NA)   anime embedding table, transposed (resident)
    w1u_ref / w1a_ref : (H, E)    fc1 weight halves, transposed (resident)
    b1_ref            : (H, 1)
    w2_ref            : (1, H)
    b2_ref            : (1, 1)    SMEM scalar
    out_ref           : (1, TB)   lane-dense output row
    """
    E = utab_ref.shape[0]
    TB = out_ref.shape[1]

    # In-kernel embedding gather along lanes: ids already live on the lane axis,
    # result is the lane-dense (E, TB) transposed embedding tile directly.
    uid = jnp.broadcast_to(uid_ref[...], (E, TB))
    aid = jnp.broadcast_to(aid_ref[...], (E, TB))
    ue_t = jnp.take_along_axis(utab_ref[...], uid, axis=1)        # (E, TB)
    ae_t = jnp.take_along_axis(atab_ref[...], aid, axis=1)        # (E, TB)

    # fc1, concat folded into two matmuls, transposed orientation -> (H, TB).
    h_t = jnp.dot(w1u_ref[...], ue_t, preferred_element_type=jnp.float32)
    h_t = h_t + jnp.dot(w1a_ref[...], ae_t, preferred_element_type=jnp.float32)
    h_t = jnp.maximum(h_t + b1_ref[...], 0.0)                     # ReLU, lane-dense

    # fc2 as a plain (1,H)@(H,TB) matmul -> lane-dense (1, TB), no transpose.
    y = jnp.dot(w2_ref[...], h_t, preferred_element_type=jnp.float32)
    out_ref[...] = y + b2_ref[0, 0]


def _pregathered_kernel(ue_ref, ae_ref, w1u_ref, w1a_ref, b1_ref, w2_ref,
                        b2_ref, out_ref):
    """Fallback body: same lane-dense math, embeddings gathered by XLA.

    ue_ref / ae_ref : (E, TB)  transposed embedding tiles (streamed)
    """
    h_t = jnp.dot(w1u_ref[...], ue_ref[...], preferred_element_type=jnp.float32)
    h_t = h_t + jnp.dot(w1a_ref[...], ae_ref[...],
                        preferred_element_type=jnp.float32)
    h_t = jnp.maximum(h_t + b1_ref[...], 0.0)
    y = jnp.dot(w2_ref[...], h_t, preferred_element_type=jnp.float32)
    out_ref[...] = y + b2_ref[0, 0]


# ----------------------------------------------------------------------------
# Wrappers
# ----------------------------------------------------------------------------
def _forward_fused_gather(uid, aid, params, w1u_t, w1a_t, b1_col, w2_row, b2,
                          *, E, H, TB, B_pad, n_tiles):
    # Transposed tables, padded along the id axis to a multiple of 128 so the
    # in-kernel lane gather stays aligned.  (In production these would be
    # pre-transposed once at parameter-prep time.)
    utab = params["user_emb"].T
    atab = params["anime_emb"].T
    NU = _round_up(utab.shape[1], 128)
    NA = _round_up(atab.shape[1], 128)
    utab = jnp.pad(utab, ((0, 0), (0, NU - utab.shape[1])))
    atab = jnp.pad(atab, ((0, 0), (0, NA - atab.shape[1])))

    flops = 2 * B_pad * (2 * E * H + H)
    bytes_accessed = (2 * B_pad * 4                # streamed ids
                      + B_pad * 4                  # output row
                      + (NU + NA) * E * 4          # tables, read once
                      + (2 * E * H + 2 * H) * 4)   # weights / biases

    return pl.pallas_call(
        _fused_gather_kernel,
        out_shape=jax.ShapeDtypeStruct((1, B_pad), jnp.float32),
        grid=(n_tiles,),
        in_specs=[
            pl.BlockSpec((1, TB), lambda i: (0, i)),     # user ids (streamed)
            pl.BlockSpec((1, TB), lambda i: (0, i)),     # anime ids (streamed)
            pl.BlockSpec((E, NU), lambda i: (0, 0)),     # user table (resident)
            pl.BlockSpec((E, NA), lambda i: (0, 0)),     # anime table (resident)
            pl.BlockSpec((H, E), lambda i: (0, 0)),      # W1 user half^T
            pl.BlockSpec((H, E), lambda i: (0, 0)),      # W1 anime half^T
            pl.BlockSpec((H, 1), lambda i: (0, 0)),      # b1 column
            pl.BlockSpec((1, H), lambda i: (0, 0)),      # W2 row
            pl.BlockSpec(memory_space=pltpu.SMEM),       # b2 scalar
        ],
        out_specs=pl.BlockSpec((1, TB), lambda i: (0, i)),
        compiler_params=pltpu.CompilerParams(
            dimension_semantics=("parallel",),
            vmem_limit_bytes=32 * 1024 * 1024,           # explicit budget (v7x-safe)
        ),
        cost_estimate=pl.CostEstimate(flops=flops, transcendentals=0,
                                      bytes_accessed=bytes_accessed),
    )(uid, aid, utab, atab, w1u_t, w1a_t, b1_col, w2_row, b2)


def _forward_pregathered(uid, aid, params, w1u_t, w1a_t, b1_col, w2_row, b2,
                         *, E, H, TB, B_pad, n_tiles):
    # XLA-side gather from the transposed tables so the kernel still only sees
    # lane-dense (E, TB) tiles (no in-kernel relayout, no lane padding).
    ue_t = jnp.take(params["user_emb"].T, uid[0], axis=1)    # (E, B_pad)
    ae_t = jnp.take(params["anime_emb"].T, aid[0], axis=1)   # (E, B_pad)

    flops = 2 * B_pad * (2 * E * H + H)
    bytes_accessed = 2 * B_pad * E * 4 + B_pad * 4 + (2 * E * H + 2 * H) * 4

    return pl.pallas_call(
        _pregathered_kernel,
        out_shape=jax.ShapeDtypeStruct((1, B_pad), jnp.float32),
        grid=(n_tiles,),
        in_specs=[
            pl.BlockSpec((E, TB), lambda i: (0, i)),     # user emb^T (streamed)
            pl.BlockSpec((E, TB), lambda i: (0, i)),     # anime emb^T (streamed)
            pl.BlockSpec((H, E), lambda i: (0, 0)),      # W1 user half^T
            pl.BlockSpec((H, E), lambda i: (0, 0)),      # W1 anime half^T
            pl.BlockSpec((H, 1), lambda i: (0, 0)),      # b1 column
            pl.BlockSpec((1, H), lambda i: (0, 0)),      # W2 row
            pl.BlockSpec(memory_space=pltpu.SMEM),       # b2 scalar
        ],
        out_specs=pl.BlockSpec((1, TB), lambda i: (0, i)),
        compiler_params=pltpu.CompilerParams(
            dimension_semantics=("parallel",),
            vmem_limit_bytes=32 * 1024 * 1024,
        ),
        cost_estimate=pl.CostEstimate(flops=flops, transcendentals=0,
                                      bytes_accessed=bytes_accessed),
    )(ue_t, ae_t, w1u_t, w1a_t, b1_col, w2_row, b2)


def collabfnet_forward(user_ids, anime_ids, params):
    E = params["user_emb"].shape[1]
    H = params["w1"].shape[1]
    B = user_ids.shape[0]

    # Batch tile: multiple of 128 (lane-dense), capped at _TB_TARGET, and forced
    # to >=2 tiles for B >= 256 so the "parallel" grid axis can shard across
    # both TensorCores on v7x.
    B128 = _round_up(max(B, 1), 128)
    if B128 >= 256:
        TB = min(_TB_TARGET, _round_up((B128 + 1) // 2, 128))
    else:
        TB = B128
    B_pad = _round_up(B128, TB)
    n_tiles = B_pad // TB

    # Pad ids with valid index 0; padded rows compute garbage that is sliced off.
    uid = jnp.pad(jnp.asarray(user_ids, jnp.int32), (0, B_pad - B)).reshape(1, B_pad)
    aid = jnp.pad(jnp.asarray(anime_ids, jnp.int32), (0, B_pad - B)).reshape(1, B_pad)

    # fc1 split across the concat boundary, everything transposed (batch->lanes).
    w1u_t = params["w1"][:E].T                     # (H, E) user half
    w1a_t = params["w1"][E:].T                     # (H, E) anime half
    b1_col = params["b1"].reshape(H, 1)            # (H, 1)
    w2_row = params["w2"].reshape(1, H)            # (1, H)
    b2 = params["b2"].reshape(1, 1)                # SMEM scalar

    common = dict(E=E, H=H, TB=TB, B_pad=B_pad, n_tiles=n_tiles)

    try:
        out = _forward_fused_gather(uid, aid, params, w1u_t, w1a_t, b1_col,
                                    w2_row, b2, **common)
    except Exception:
        # TODO(synk): the in-kernel dynamic gather (take_along_axis ->
        # tpu.dynamic_gather) is not supported by every jax/Mosaic version;
        # fall back to an XLA-side gather feeding the same lane-dense kernel.
        out = _forward_pregathered(uid, aid, params, w1u_t, w1a_t, b1_col,
                                   w2_row, b2, **common)

    # torch: x.squeeze() -> (B,) for B > 1, scalar for B == 1
    return jnp.squeeze(out[0, :B])


# ----------------------------------------------------------------------------
# Params / reference
# ----------------------------------------------------------------------------
def init_params(key, n_users, n_animes, embed_dim, hidden_dim):
    k = jax.random.split(key, 6)
    scale_fc1 = 1.0 / jnp.sqrt(jnp.float32(embed_dim * 2))
    scale_fc2 = 1.0 / jnp.sqrt(jnp.float32(hidden_dim))
    # NOTE: tables kept f32 for the tight self-test tolerance; storing them in
    # bf16 (f32 MXU accumulation unchanged) halves HBM bytes if desired.
    return {
        # nn.Embedding init ~ N(0, 1)
        "user_emb": jax.random.normal(k[0], (n_users, embed_dim), jnp.float32),
        "anime_emb": jax.random.normal(k[1], (n_animes, embed_dim), jnp.float32),
        # nn.Linear init ~ U(-1/sqrt(fan_in), 1/sqrt(fan_in)); stored as (in, out)
        "w1": jax.random.uniform(k[2], (embed_dim * 2, hidden_dim), jnp.float32,
                                 -scale_fc1, scale_fc1),
        "b1": jax.random.uniform(k[3], (1, hidden_dim), jnp.float32,
                                 -scale_fc1, scale_fc1),
        "w2": jax.random.uniform(k[4], (hidden_dim, 1), jnp.float32,
                                 -scale_fc2, scale_fc2),
        "b2": jax.random.uniform(k[5], (1, 1), jnp.float32,
                                 -scale_fc2, scale_fc2),
    }


def _reference_forward(user_ids, anime_ids, params):
    ue = params["user_emb"][user_ids]
    ae = params["anime_emb"][anime_ids]
    x = jnp.concatenate([ue, ae], axis=1)
    h = jnp.maximum(x @ params["w1"] + params["b1"], 0.0)
    return (h @ params["w2"] + params["b2"]).squeeze()


if __name__ == "__main__":
    n_users, n_animes = 50, 60
    embed_dim, hidden_dim = 16, 32
    batch = 8

    key = jax.random.PRNGKey(0)
    k_params, k_u, k_a = jax.random.split(key, 3)

    params = init_params(k_params, n_users, n_animes, embed_dim, hidden_dim)
    user_ids = jax.random.randint(k_u, (batch,), 0, n_users, dtype=jnp.int32)
    anime_ids = jax.random.randint(k_a, (batch,), 0, n_animes, dtype=jnp.int32)

    out = collabfnet_forward(user_ids, anime_ids, params)
    out = jax.block_until_ready(out)

    ref = _reference_forward(user_ids, anime_ids, params)
    assert out.shape == (batch,), out.shape
    assert jnp.allclose(out, ref, atol=1e-5, rtol=1e-5), float(jnp.max(jnp.abs(out - ref)))

    print("KERNEL_OK")
</pallas_src>

<mosaic_0001>
module attributes {stable_mosaic.version = 11 : i64} {
  func.func @_fused_gather_kernel(%arg0: i32, %arg1: memref<1x128xi32, #tpu.memory_space<vmem>>, %arg2: memref<1x128xi32, #tpu.memory_space<vmem>>, %arg3: memref<16x128xf32, #tpu.memory_space<vmem>>, %arg4: memref<16x128xf32, #tpu.memory_space<vmem>>, %arg5: memref<32x16xf32, #tpu.memory_space<vmem>>, %arg6: memref<32x16xf32, #tpu.memory_space<vmem>>, %arg7: memref<32x1xf32, #tpu.memory_space<vmem>>, %arg8: memref<1x32xf32, #tpu.memory_space<vmem>>, %arg9: memref<1x1xf32, #tpu.memory_space<smem>>, %arg10: memref<1x128xf32, #tpu.memory_space<vmem>>) attributes {dimension_semantics = [#tpu.dimension_semantics<parallel>], iteration_bounds = array<i64: 1>, scalar_prefetch = 0 : i64, scratch_operands = 0 : i64, tpu.core_type = #tpu.core_type<tc>, window_params = [{transform_indices = @transform_0, window_bounds = array<i64: 1, 128>}, {transform_indices = @transform_1, window_bounds = array<i64: 1, 128>}, {pipeline_mode = #tpu.pipeline_mode<synchronous>, transform_indices = @transform_2, window_bounds = array<i64: 16, 128>}, {pipeline_mode = #tpu.pipeline_mode<synchronous>, transform_indices = @transform_3, window_bounds = array<i64: 16, 128>}, {pipeline_mode = #tpu.pipeline_mode<synchronous>, transform_indices = @transform_4, window_bounds = array<i64: 32, 16>}, {pipeline_mode = #tpu.pipeline_mode<synchronous>, transform_indices = @transform_5, window_bounds = array<i64: 32, 16>}, {pipeline_mode = #tpu.pipeline_mode<synchronous>, transform_indices = @transform_6, window_bounds = array<i64: 32, 1>}, {pipeline_mode = #tpu.pipeline_mode<synchronous>, transform_indices = @transform_7, window_bounds = array<i64: 1, 32>}, {transform_indices = @transform_8, window_bounds = array<i64: 1, 1>}, {transform_indices = @transform_9, window_bounds = array<i64: 1, 128>}]} {
    %c0 = arith.constant 0 : index
    %c0_0 = arith.constant 0 : index
    %0 = vector.load %arg1[%c0, %c0_0] : memref<1x128xi32, #tpu.memory_space<vmem>>, vector<1x128xi32>
    %1 = vector.shape_cast %0 : vector<1x128xi32> to vector<1x128xi32>
    %2 = vector.broadcast %1 : vector<1x128xi32> to vector<16x128xi32>
    %c0_1 = arith.constant 0 : index
    %c0_2 = arith.constant 0 : index
    %3 = vector.load %arg2[%c0_1, %c0_2] : memref<1x128xi32, #tpu.memory_space<vmem>>, vector<1x128xi32>
    %4 = vector.shape_cast %3 : vector<1x128xi32> to vector<1x128xi32>
    %5 = vector.broadcast %4 : vector<1x128xi32> to vector<16x128xi32>
    %c0_3 = arith.constant 0 : index
    %c0_4 = arith.constant 0 : index
    %6 = vector.load %arg3[%c0_3, %c0_4] : memref<16x128xf32, #tpu.memory_space<vmem>>, vector<16x128xf32>
    %c0_i32 = arith.constant 0 : i32
    %7 = vector.broadcast %c0_i32 : i32 to vector<16x128xi32>
    %8 = arith.cmpi slt, %2, %7 : vector<16x128xi32>
    %c128_i32 = arith.constant 128 : i32
    %9 = vector.broadcast %c128_i32 : i32 to vector<16x128xi32>
    %10 = arith.addi %2, %9 : vector<16x128xi32>
    %11 = arith.select %8, %10, %2 : vector<16x128xi1>, vector<16x128xi32>
    %12 = vector.shape_cast %11 : vector<16x128xi32> to vector<16x128x1xi32>
    %13 = vector.shape_cast %12 : vector<16x128x1xi32> to vector<16x128xi32>
    %14 = tpu.dynamic_gather %6[%13] in [1] : vector<16x128xf32>, vector<16x128xi32> -> vector<16x128xf32>
    %c0_5 = arith.constant 0 : index
    %c0_6 = arith.constant 0 : index
    %15 = vector.load %arg4[%c0_5, %c0_6] : memref<16x128xf32, #tpu.memory_space<vmem>>, vector<16x128xf32>
    %c0_i32_7 = arith.constant 0 : i32
    %16 = vector.broadcast %c0_i32_7 : i32 to vector<16x128xi32>
    %17 = arith.cmpi slt, %5, %16 : vector<16x128xi32>
    %c128_i32_8 = arith.constant 128 : i32
    %18 = vector.broadcast %c128_i32_8 : i32 to vector<16x128xi32>
    %19 = arith.addi %5, %18 : vector<16x128xi32>
    %20 = arith.select %17, %19, %5 : vector<16x128xi1>, vector<16x128xi32>
    %21 = vector.shape_cast %20 : vector<16x128xi32> to vector<16x128x1xi32>
    %22 = vector.shape_cast %21 : vector<16x128x1xi32> to vector<16x128xi32>
    %23 = tpu.dynamic_gather %15[%22] in [1] : vector<16x128xf32>, vector<16x128xi32> -> vector<16x128xf32>
    %c0_9 = arith.constant 0 : index
    %c0_10 = arith.constant 0 : index
    %24 = vector.load %arg5[%c0_9, %c0_10] : memref<32x16xf32, #tpu.memory_space<vmem>>, vector<32x16xf32>
    %cst = arith.constant dense<0.000000e+00> : vector<32x128xf32>
    %25 = tpu.matmul %24, %14, %cst {dimension_numbers = #tpu.dot_dimension_numbers<[1], [0], [0], [1], [0, 0, 1, 1], [], []>} : vector<32x16xf32>, vector<16x128xf32>, vector<32x128xf32> -> vector<32x128xf32>
    %c0_11 = arith.constant 0 : index
    %c0_12 = arith.constant 0 : index
    %26 = vector.load %arg6[%c0_11, %c0_12] : memref<32x16xf32, #tpu.memory_space<vmem>>, vector<32x16xf32>
    %cst_13 = arith.constant dense<0.000000e+00> : vector<32x128xf32>
    %27 = tpu.matmul %26, %23, %cst_13 {dimension_numbers = #tpu.dot_dimension_numbers<[1], [0], [0], [1], [0, 0, 1, 1], [], []>} : vector<32x16xf32>, vector<16x128xf32>, vector<32x128xf32> -> vector<32x128xf32>
    %28 = arith.addf %25, %27 : vector<32x128xf32>
    %c0_14 = arith.constant 0 : index
    %c0_15 = arith.constant 0 : index
    %29 = vector.load %arg7[%c0_14, %c0_15] : memref<32x1xf32, #tpu.memory_space<vmem>>, vector<32x1xf32>
    %30 = vector.broadcast %29 : vector<32x1xf32> to vector<32x128xf32>
    %31 = arith.addf %28, %30 : vector<32x128xf32>
    %cst_16 = arith.constant 0.000000e+00 : f32
    %32 = vector.broadcast %cst_16 : f32 to vector<32x128xf32>
    %33 = arith.maximumf %31, %32 : vector<32x128xf32>
    %c0_17 = arith.constant 0 : index
    %c0_18 = arith.constant 0 : index
    %34 = vector.load %arg8[%c0_17, %c0_18] : memref<1x32xf32, #tpu.memory_space<vmem>>, vector<1x32xf32>
    %cst_19 = arith.constant dense<0.000000e+00> : vector<1x128xf32>
    %35 = tpu.matmul %34, %33, %cst_19 {dimension_numbers = #tpu.dot_dimension_numbers<[1], [0], [0], [1], [0, 0, 1, 1], [], []>} : vector<1x32xf32>, vector<32x128xf32>, vector<1x128xf32> -> vector<1x128xf32>
    %c0_20 = arith.constant 0 : index
    %c0_21 = arith.constant 0 : index
    %36 = memref.load %arg9[%c0_20, %c0_21] : memref<1x1xf32, #tpu.memory_space<smem>>
    %37 = vector.broadcast %36 : f32 to vector<1x128xf32>
    %38 = arith.addf %35, %37 : vector<1x128xf32>
    %c0_22 = arith.constant 0 : index
    %c0_23 = arith.constant 0 : index
    %39 = vector.load %arg10[%c0_22, %c0_23] : memref<1x128xf32, #tpu.memory_space<vmem>>, vector<1x128xf32>
    tpu.vector_store %arg10[%c0_22, %c0_23], %38 {strides = array<i32>} : memref<1x128xf32, #tpu.memory_space<vmem>>, vector<1x128xf32>,
    return
  }
  func.func @transform_0(%arg0: i32) -> (i32, i32) {
    %c0_i32 = arith.constant 0 : i32
    %c0_i32_0 = arith.constant 0 : i32
    return %c0_i32, %arg0 : i32, i32
  }
  func.func @transform_1(%arg0: i32) -> (i32, i32) {
    %c0_i32 = arith.constant 0 : i32
    %c0_i32_0 = arith.constant 0 : i32
    return %c0_i32, %arg0 : i32, i32
  }
  func.func @transform_2(%arg0: i32) -> (i32, i32) {
    %c0_i32 = arith.constant 0 : i32
    %c0_i32_0 = arith.constant 0 : i32
    %c0_i32_1 = arith.constant 0 : i32
    return %c0_i32, %c0_i32_0 : i32, i32
  }
  func.func @transform_3(%arg0: i32) -> (i32, i32) {
    %c0_i32 = arith.constant 0 : i32
    %c0_i32_0 = arith.constant 0 : i32
    %c0_i32_1 = arith.constant 0 : i32
    return %c0_i32, %c0_i32_0 : i32, i32
  }
  func.func @transform_4(%arg0: i32) -> (i32, i32) {
    %c0_i32 = arith.constant 0 : i32
    %c0_i32_0 = arith.constant 0 : i32
    %c0_i32_1 = arith.constant 0 : i32
    return %c0_i32, %c0_i32_0 : i32, i32
  }
  func.func @transform_5(%arg0: i32) -> (i32, i32) {
    %c0_i32 = arith.constant 0 : i32
    %c0_i32_0 = arith.constant 0 : i32
    %c0_i32_1 = arith.constant 0 : i32
    return %c0_i32, %c0_i32_0 : i32, i32
  }
  func.func @transform_6(%arg0: i32) -> (i32, i32) {
    %c0_i32 = arith.constant 0 : i32
    %c0_i32_0 = arith.constant 0 : i32
    %c0_i32_1 = arith.constant 0 : i32
    return %c0_i32, %c0_i32_0 : i32, i32
  }
  func.func @transform_7(%arg0: i32) -> (i32, i32) {
    %c0_i32 = arith.constant 0 : i32
    %c0_i32_0 = arith.constant 0 : i32
    %c0_i32_1 = arith.constant 0 : i32
    return %c0_i32, %c0_i32_0 : i32, i32
  }
  func.func @transform_8(%arg0: i32) -> (i32, i32) {
    %c0_i32 = arith.constant 0 : i32
    %c0_i32_0 = arith.constant 0 : i32
    %c0_i32_1 = arith.constant 0 : i32
    return %c0_i32, %c0_i32_0 : i32, i32
  }
  func.func @transform_9(%arg0: i32) -> (i32, i32) {
    %c0_i32 = arith.constant 0 : i32
    %c0_i32_0 = arith.constant 0 : i32
    return %c0_i32, %arg0 : i32, i32
  }
}

module attributes {stable_mosaic.version = 11 : i64} {
  func.func @_pregathered_kernel(%arg0: i32, %arg1: memref<16x128xf32, #tpu.memory_space<vmem>>, %arg2: memref<16x128xf32, #tpu.memory_space<vmem>>, %arg3: memref<32x16xf32, #tpu.memory_space<vmem>>, %arg4: memref<32x16xf32, #tpu.memory_space<vmem>>, %arg5: memref<32x1xf32, #tpu.memory_space<vmem>>, %arg6: memref<1x32xf32, #tpu.memory_space<vmem>>, %arg7: memref<1x1xf32, #tpu.memory_space<smem>>, %arg8: memref<1x128xf32, #tpu.memory_space<vmem>>) attributes {dimension_semantics = [#tpu.dimension_semantics<parallel>], iteration_bounds = array<i64: 1>, scalar_prefetch = 0 : i64, scratch_operands = 0 : i64, tpu.core_type = #tpu.core_type<tc>, window_params = [{transform_indices = @transform_0, window_bounds = array<i64: 16, 128>}, {transform_indices = @transform_1, window_bounds = array<i64: 16, 128>}, {pipeline_mode = #tpu.pipeline_mode<synchronous>, transform_indices = @transform_2, window_bounds = array<i64: 32, 16>}, {pipeline_mode = #tpu.pipeline_mode<synchronous>, transform_indices = @transform_3, window_bounds = array<i64: 32, 16>}, {pipeline_mode = #tpu.pipeline_mode<synchronous>, transform_indices = @transform_4, window_bounds = array<i64: 32, 1>}, {pipeline_mode = #tpu.pipeline_mode<synchronous>, transform_indices = @transform_5, window_bounds = array<i64: 1, 32>}, {transform_indices = @transform_6, window_bounds = array<i64: 1, 1>}, {transform_indices = @transform_7, window_bounds = array<i64: 1, 128>}]} {
    %c0 = arith.constant 0 : index
    %c0_0 = arith.constant 0 : index
    %0 = vector.load %arg3[%c0, %c0_0] : memref<32x16xf32, #tpu.memory_space<vmem>>, vector<32x16xf32>
    %c0_1 = arith.constant 0 : index
    %c0_2 = arith.constant 0 : index
    %1 = vector.load %arg1[%c0_1, %c0_2] : memref<16x128xf32, #tpu.memory_space<vmem>>, vector<16x128xf32>
    %cst = arith.constant dense<0.000000e+00> : vector<32x128xf32>
    %2 = tpu.matmul %0, %1, %cst {dimension_numbers = #tpu.dot_dimension_numbers<[1], [0], [0], [1], [0, 0, 1, 1], [], []>} : vector<32x16xf32>, vector<16x128xf32>, vector<32x128xf32> -> vector<32x128xf32>
    %c0_3 = arith.constant 0 : index
    %c0_4 = arith.constant 0 : index
    %3 = vector.load %arg4[%c0_3, %c0_4] : memref<32x16xf32, #tpu.memory_space<vmem>>, vector<32x16xf32>
    %c0_5 = arith.constant 0 : index
    %c0_6 = arith.constant 0 : index
    %4 = vector.load %arg2[%c0_5, %c0_6] : memref<16x128xf32, #tpu.memory_space<vmem>>, vector<16x128xf32>
    %cst_7 = arith.constant dense<0.000000e+00> : vector<32x128xf32>
    %5 = tpu.matmul %3, %4, %cst_7 {dimension_numbers = #tpu.dot_dimension_numbers<[1], [0], [0], [1], [0, 0, 1, 1], [], []>} : vector<32x16xf32>, vector<16x128xf32>, vector<32x128xf32> -> vector<32x128xf32>
    %6 = arith.addf %2, %5 : vector<32x128xf32>
    %c0_8 = arith.constant 0 : index
    %c0_9 = arith.constant 0 : index
    %7 = vector.load %arg5[%c0_8, %c0_9] : memref<32x1xf32, #tpu.memory_space<vmem>>, vector<32x1xf32>
    %8 = vector.broadcast %7 : vector<32x1xf32> to vector<32x128xf32>
    %9 = arith.addf %6, %8 : vector<32x128xf32>
    %cst_10 = arith.constant 0.000000e+00 : f32
    %10 = vector.broadcast %cst_10 : f32 to vector<32x128xf32>
    %11 = arith.maximumf %9, %10 : vector<32x128xf32>
    %c0_11 = arith.constant 0 : index
    %c0_12 = arith.constant 0 : index
    %12 = vector.load %arg6[%c0_11, %c0_12] : memref<1x32xf32, #tpu.memory_space<vmem>>, vector<1x32xf32>
    %cst_13 = arith.constant dense<0.000000e+00> : vector<1x128xf32>
    %13 = tpu.matmul %12, %11, %cst_13 {dimension_numbers = #tpu.dot_dimension_numbers<[1], [0], [0], [1], [0, 0, 1, 1], [], []>} : vector<1x32xf32>, vector<32x128xf32>, vector<1x128xf32> -> vector<1x128xf32>
    %c0_14 = arith.constant 0 : index
    %c0_15 = arith.constant 0 : index
    %14 = memref.load %arg7[%c0_14, %c0_15] : memref<1x1xf32, #tpu.memory_space<smem>>
    %15 = vector.broadcast %14 : f32 to vector<1x128xf32>
    %16 = arith.addf %13, %15 : vector<1x128xf32>
    %c0_16 = arith.constant 0 : index
    %c0_17 = arith.constant 0 : index
    %17 = vector.load %arg8[%c0_16, %c0_17] : memref<1x128xf32, #tpu.memory_space<vmem>>, vector<1x128xf32>
    tpu.vector_store %arg8[%c0_16, %c0_17], %16 {strides = array<i32>} : memref<1x128xf32, #tpu.memory_space<vmem>>, vector<1x128xf32>,
    return
  }
  func.func @transform_0(%arg0: i32) -> (i32, i32) {
    %c0_i32 = arith.constant 0 : i32
    %c0_i32_0 = arith.constant 0 : i32
    return %c0_i32, %arg0 : i32, i32
  }
  func.func @transform_1(%arg0: i32) -> (i32, i32) {
    %c0_i32 = arith.constant 0 : i32
    %c0_i32_0 = arith.constant 0 : i32
    return %c0_i32, %arg0 : i32, i32
  }
  func.func @transform_2(%arg0: i32) -> (i32, i32) {
    %c0_i32 = arith.constant 0 : i32
    %c0_i32_0 = arith.constant 0 : i32
    %c0_i32_1 = arith.constant 0 : i32
    return %c0_i32, %c0_i32_0 : i32, i32
  }
  func.func @transform_3(%arg0: i32) -> (i32, i32) {
    %c0_i32 = arith.constant 0 : i32
    %c0_i32_0 = arith.constant 0 : i32
    %c0_i32_1 = arith.constant 0 : i32
    return %c0_i32, %c0_i32_0 : i32, i32
  }
  func.func @transform_4(%arg0: i32) -> (i32, i32) {
    %c0_i32 = arith.constant 0 : i32
    %c0_i32_0 = arith.constant 0 : i32
    %c0_i32_1 = arith.constant 0 : i32
    return %c0_i32, %c0_i32_0 : i32, i32
  }
  func.func @transform_5(%arg0: i32) -> (i32, i32) {
    %c0_i32 = arith.constant 0 : i32
    %c0_i32_0 = arith.constant 0 : i32
    %c0_i32_1 = arith.constant 0 : i32
    return %c0_i32, %c0_i32_0 : i32, i32
  }
  func.func @transform_6(%arg0: i32) -> (i32, i32) {
    %c0_i32 = arith.constant 0 : i32
    %c0_i32_0 = arith.constant 0 : i32
    %c0_i32_1 = arith.constant 0 : i32
    return %c0_i32, %c0_i32_0 : i32, i32
  }
  func.func @transform_7(%arg0: i32) -> (i32, i32) {
    %c0_i32 = arith.constant 0 : i32
    %c0_i32_0 = arith.constant 0 : i32
    return %c0_i32, %arg0 : i32, i32
  }
}

</mosaic_0001>

<llo_original>
// kernel: tpu_custom_call.1
$region0: #{tpu_custom_call.1}
  #allocation0 [shape = 'u32[]', space=smem, size = 0x4, offset = 0x4, fixed_abs, tag = 'smem constant byte address 0x4 - core index']
  #allocation1 [shape = 'u32[144,128]{1,0:T(1,128)}', space=vmem, size = 0x12000, scoped, tag = 'internal scratch']
  #allocation2 [shape = 'f32[1,1]{1,0:T(1,128)S(6)}', space=smem, size = 0x200, scoped, tag = 'scoped memory for tpu_custom_call.1']
  %s0 = inlined_call_operand.vmem [shape: s32[1,128], index: 0, kind: input, shape index: {}]
  %s1 = inlined_call_operand.vmem [shape: s32[1,128], index: 1, kind: input, shape index: {}]
  %s2 = inlined_call_operand.vmem [shape: f32[16,128], index: 2, kind: input, shape index: {}]
  %s3 = inlined_call_operand.vmem [shape: f32[16,128], index: 3, kind: input, shape index: {}]
  %s4 = inlined_call_operand.vmem [shape: f32[32,16], index: 4, kind: input, shape index: {}]
  %s5 = inlined_call_operand.vmem [shape: f32[32,16], index: 5, kind: input, shape index: {}]
  %s6 = inlined_call_operand.vmem [shape: f32[32,1], index: 6, kind: input, shape index: {}]
  %s7 = inlined_call_operand.vmem [shape: f32[1,32], index: 7, kind: input, shape index: {}]
  %s8 = inlined_call_operand.<no memory space> [shape: f32[1,1], index: 8, kind: input, shape index: {}]
  %s9 = inlined_call_operand.hbm [shape: f32[1,128], index: 9, kind: output, shape index: {}]
  %s10 = sld [smem:[#allocation0]]
  $region46: #{tpu_custom_call.1} parent=0
    _
  %s12 = ssub.s32 1, %s10
  %s13 = scalar_select 0, %s12, %s10
  %14 = sst [smem:[#allocation2]] %s8
  $region1: #{tpu_custom_call.1} parent=0
    #allocation3 [shape = 'u8[512]{0}', space=vmem, size = 0x400, scoped, tag = 'output window, operand 0, single buffered']
    #allocation4 [shape = 's32[1]{0}', space=sflag, size = 0x4, scoped, tag = 'scoped memory for tpu_custom_call.1']
    %15 = vsyncpa [#allocation4], 0
    // Predicated region
    $region2: #{tpu_custom_call.1} parent=1 // pred_check
      _
    $region3: #{tpu_custom_call.1} parent=1 // pred_check_branch
      %17 = sbr.rel (0) target = $region5
    $region4: #{tpu_custom_call.1} parent=1 // pred_region
      _
    $region5: #{tpu_custom_call.1} parent=1 // pred_fallthru
      _
    // Predicated region
    $region6: #{tpu_custom_call.1} parent=1 // pred_check
      _
    $region7: #{tpu_custom_call.1} parent=1 // pred_check_branch
      %19 = sbr.rel (0) target = $region9
    $region8: #{tpu_custom_call.1} parent=1 // pred_region
      _
    $region9: #{tpu_custom_call.1} parent=1 // pred_fallthru
      _
    // Predicated region
    $region10: #{tpu_custom_call.1} parent=1 // pred_check
      _
    $region11: #{tpu_custom_call.1} parent=1 // pred_check_branch
      %21 = sbr.rel (0) target = $region13
    $region12: #{tpu_custom_call.1} parent=1 // pred_region
      _
    $region13: #{tpu_custom_call.1} parent=1 // pred_fallthru
      _
    // Predicated region
    $region14: #{tpu_custom_call.1} parent=1 // pred_check
      _
    $region15: #{tpu_custom_call.1} parent=1 // pred_check_branch
      %23 = sbr.rel (0) target = $region17
    $region16: #{tpu_custom_call.1} parent=1 // pred_region
      _
    $region17: #{tpu_custom_call.1} parent=1 // pred_fallthru
      _
    // Predicated region
    $region18: #{tpu_custom_call.1} parent=1 // pred_check
      _
    $region19: #{tpu_custom_call.1} parent=1 // pred_check_branch
      %25 = sbr.rel (0) target = $region21
    $region20: #{tpu_custom_call.1} parent=1 // pred_region
      _
    $region21: #{tpu_custom_call.1} parent=1 // pred_fallthru
      _
    // Predicated region
    $region22: #{tpu_custom_call.1} parent=1 // pred_check
      _
    $region23: #{tpu_custom_call.1} parent=1 // pred_check_branch
      %27 = sbr.rel (0) target = $region25
    $region24: #{tpu_custom_call.1} parent=1 // pred_region
      _
    $region25: #{tpu_custom_call.1} parent=1 // pred_fallthru
      _
    // Predicated region
    $region26: #{tpu_custom_call.1} parent=1 // pred_check
      _
    $region27: #{tpu_custom_call.1} parent=1 // pred_check_branch
      %29 = sbr.rel (0) target = $region29
    $region28: #{tpu_custom_call.1} parent=1 // pred_region
      _
    $region29: #{tpu_custom_call.1} parent=1 // pred_fallthru
      _
    // Predicated region
    $region30: #{tpu_custom_call.1} parent=1 // pred_check
      _
    $region31: #{tpu_custom_call.1} parent=1 // pred_check_branch
      %31 = sbr.rel (0) target = $region33
    $region32: #{tpu_custom_call.1} parent=1 // pred_region
      _
    $region33: #{tpu_custom_call.1} parent=1 // pred_fallthru
      _
    // Predicated region
    $region34: #{tpu_custom_call.1} parent=1 // pred_check
      _
    $region35: #{tpu_custom_call.1} parent=1 // pred_check_branch
      %33 = sbr.rel (0) target = $region37
    $region36: #{tpu_custom_call.1} parent=1 // pred_region
      _
    $region37: #{tpu_custom_call.1} parent=1 // pred_fallthru
      _
    %v34 = vld [vmem:[%s0] sm:$0x1]
    %v35 = vlaneseq
    %v36 = vshrl.u32 %v35, 7
    %v37 = vsub.s32 0, %v36
    %v38 = vrot.slane %v34, %v37
    %v39 = vld [vmem:[%s1] sm:$0x1]
    %v40 = vlaneseq
    %v41 = vshrl.u32 %v40, 7
    %v42 = vsub.s32 0, %v41
    %v43 = vrot.slane %v39, %v42
    %v44 = vld [vmem:[%s2] sm:$0xff]
    %v45 = vld [vmem:[%s2 + $0x8] sm:$0xff]
    %vm46 = vcmp.lt.s32.totalorder %v38, 0
    %v47 = vadd.s32 %v38, 128
    %v48 = vsel %vm46, %v47, %v38
    %49 = vset.pattern.permute.xlu0 %v48
    %50 = vperm.xlu0 %49, %v44
    %v51 = vpop.permute.xlu0 %50
    %52 = vset.pattern.permute.xlu0 %v48
    %53 = vperm.xlu0 %52, %v45
    %v54 = vpop.permute.xlu0 %53
    %v55 = vld [vmem:[%s3] sm:$0xff]
    %v56 = vld [vmem:[%s3 + $0x8] sm:$0xff]
    %vm57 = vcmp.lt.s32.totalorder %v43, 0
    %v58 = vadd.s32 %v43, 128
    %v59 = vsel %vm57, %v58, %v43
    %60 = vset.pattern.permute.xlu0 %v59
    %61 = vperm.xlu0 %60, %v55
    %v62 = vpop.permute.xlu0 %61
    %63 = vset.pattern.permute.xlu0 %v59
    %64 = vperm.xlu0 %63, %v56
    %v65 = vpop.permute.xlu0 %64
    %v66 = vld [vmem:[%s4] sm:$0xff]
    %v67 = vld [vmem:[%s4 + $0x8] sm:$0xff]
    %v68 = vld [vmem:[%s4 + $0x10] sm:$0xff]
    %v69 = vld [vmem:[%s4 + $0x18] sm:$0xff]
    %v70 = vld [vmem:[%s5] sm:$0xff]
    %v71 = vld [vmem:[%s5 + $0x8] sm:$0xff]
    %v72 = vld [vmem:[%s5 + $0x10] sm:$0xff]
    %v73 = vld [vmem:[%s5 + $0x18] sm:$0xff]
    %vm74 = vcmask 130048
    %v76 = vsel %vm74, %v70, 0
    %v79 = vsel %vm74, %v71, 0
    %v82 = vsel %vm74, %v72, 0
    %v85 = vsel %vm74, %v73, 0
    %87 = vmatprep.subr.mxu0 0.0
    %88 = vmatpush1.msra.mxu0 %v62
    %89 = vmatprep.subr.mxu0 0.0
    %90 = vmatpush1.msra.mxu0 %v65
    %91 = vmatprep.subr.mxu0 0.0
    %92 = vmatpush1.msra.mxu0 0.0
    %93 = vmatprep.subr.mxu0 0.0
    %94 = vmatpush1.msra.mxu0 0.0
    %95 = vmatprep.subr.mxu0 0.0
    %96 = vmatpush1.msra.mxu0 0.0
    %97 = vmatprep.subr.mxu0 0.0
    %98 = vmatpush1.msra.mxu0 0.0
    %99 = vmatprep.subr.mxu0 0.0
    %100 = vmatpush1.msra.mxu0 0.0
    %101 = vmatprep.subr.mxu0 0.0
    %102 = vmatpush1.msra.mxu0 0.0
    %103 = vmatprep.subr.mxu0 0.0
    %104 = vmatpush1.msra.mxu0 0.0
    %105 = vmatprep.subr.mxu0 0.0
    %106 = vmatpush1.msra.mxu0 0.0
    %107 = vmatprep.subr.mxu0 0.0
    %108 = vmatpush1.msra.mxu0 0.0
    %109 = vmatprep.subr.mxu0 0.0
    %110 = vmatpush1.msra.mxu0 0.0
    %111 = vmatprep.subr.mxu0 0.0
    %112 = vmatpush1.msra.mxu0 0.0
    %113 = vmatprep.subr.mxu0 0.0
    %114 = vmatpush1.msra.mxu0 0.0
    %115 = vmatprep.subr.mxu0 0.0
    %116 = vmatpush1.msra.mxu0 0.0
    %117 = vmatprep.subr.mxu0 0.0
    %118 = vmatpush1.msra.mxu0 0.0
    %119 = vmatprep.subr.mxu0 0.0
    %120 = vmatpush1.msra.mxu0 0.0
    %121 = vmatprep.subr.mxu0 0.0
    %122 = vmatpush1.msra.mxu0 0.0
    %123 = vmatprep.subr.mxu0 0.0
    %124 = vmatpush1.msra.mxu0 0.0
    %125 = vmatprep.subr.mxu0 0.0
    %126 = vmatpush1.msra.mxu0 0.0
    %127 = vmatprep.subr.mxu0 0.0
    %128 = vmatpush1.msra.mxu0 0.0
    %129 = vmatprep.subr.mxu0 0.0
    %130 = vmatpush1.msra.mxu0 0.0
    %131 = vmatprep.subr.mxu0 0.0
    %132 = vmatpush1.msra.mxu0 0.0
    %133 = vmatprep.subr.mxu0 0.0
    %134 = vmatpush1.msra.mxu0 0.0
    %135 = vmatprep.subr.mxu0 0.0
    %136 = vmatpush1.msra.mxu0 0.0
    %137 = vmatprep.subr.mxu0 0.0
    %138 = vmatpush1.msra.mxu0 0.0
    %139 = vmatprep.subr.mxu0 0.0
    %140 = vmatpush1.msra.mxu0 0.0
    %141 = vmatprep.subr.mxu0 0.0
    %142 = vmatpush1.msra.mxu0 0.0
    %143 = vmatprep.subr.mxu0 0.0
    %144 = vmatpush1.msra.mxu0 0.0
    %145 = vmatprep.subr.mxu0 0.0
    %146 = vmatpush1.msra.mxu0 0.0
    %147 = vmatprep.subr.mxu0 0.0
    %148 = vmatpush1.msra.mxu0 0.0
    %149 = vmatprep.subr.mxu0 0.0
    %150 = vmatpush1.msra.mxu0 0.0
    %151 = vmatprep.mubr.f32.mxu0 0.0
    %152 = vmatmul.mubr.f32.gmra.mrb[0].mxu0 %v76
    %v153 = vpop.f32.mrb[0].mxu0
    %v154 = vadd.f32 0.0, %v153
    %v155 = vpop.f32.mrb[0].mxu0
    %156 = vmatprep.mubr.f32.mxu0 0.0
    %157 = vmatmul.mubr.f32.gmra.mrb[0].mxu0 %v79
    %v158 = vpop.f32.mrb[0].mxu0
    %v159 = vadd.f32 0.0, %v158
    %v160 = vpop.f32.mrb[0].mxu0
    %161 = vmatprep.mubr.f32.mxu0 0.0
    %162 = vmatmul.mubr.f32.gmra.mrb[0].mxu0 %v82
    %v163 = vpop.f32.mrb[0].mxu0
    %v164 = vadd.f32 0.0, %v163
    %v165 = vpop.f32.mrb[0].mxu0
    %166 = vmatprep.mubr.f32.mxu0 0.0
    %167 = vmatmul.mubr.f32.gmra.mrb[0].mxu0 %v85
    %v168 = vpop.f32.mrb[0].mxu0
    %v169 = vadd.f32 0.0, %v168
    %v170 = vpop.f32.mrb[0].mxu0
    %171 = vdwg.mxu0
    %v173 = vsel %vm74, %v66, 0
    %v176 = vsel %vm74, %v67, 0
    %v179 = vsel %vm74, %v68, 0
    %v182 = vsel %vm74, %v69, 0
    %184 = vmatprep.subr.mxu0 0.0
    %185 = vmatpush1.msra.mxu0 %v51
    %186 = vmatprep.subr.mxu0 0.0
    %187 = vmatpush1.msra.mxu0 %v54
    %188 = vmatprep.subr.mxu0 0.0
    %189 = vmatpush1.msra.mxu0 0.0
    %190 = vmatprep.subr.mxu0 0.0
    %191 = vmatpush1.msra.mxu0 0.0
    %192 = vmatprep.subr.mxu0 0.0
    %193 = vmatpush1.msra.mxu0 0.0
    %194 = vmatprep.subr.mxu0 0.0
    %195 = vmatpush1.msra.mxu0 0.0
    %196 = vmatprep.subr.mxu0 0.0
    %197 = vmatpush1.msra.mxu0 0.0
    %198 = vmatprep.subr.mxu0 0.0
    %199 = vmatpush1.msra.mxu0 0.0
    %200 = vmatprep.subr.mxu0 0.0
    %201 = vmatpush1.msra.mxu0 0.0
    %202 = vmatprep.subr.mxu0 0.0
    %203 = vmatpush1.msra.mxu0 0.0
    %204 = vmatprep.subr.mxu0 0.0
    %205 = vmatpush1.msra.mxu0 0.0
    %206 = vmatprep.subr.mxu0 0.0
    %207 = vmatpush1.msra.mxu0 0.0
    %208 = vmatprep.subr.mxu0 0.0
    %209 = vmatpush1.msra.mxu0 0.0
    %210 = vmatprep.subr.mxu0 0.0
    %211 = vmatpush1.msra.mxu0 0.0
    %212 = vmatprep.subr.mxu0 0.0
    %213 = vmatpush1.msra.mxu0 0.0
    %214 = vmatprep.subr.mxu0 0.0
    %215 = vmatpush1.msra.mxu0 0.0
    %216 = vmatprep.subr.mxu0 0.0
    %217 = vmatpush1.msra.mxu0 0.0
    %218 = vmatprep.subr.mxu0 0.0
    %219 = vmatpush1.msra.mxu0 0.0
    %220 = vmatprep.subr.mxu0 0.0
    %221 = vmatpush1.msra.mxu0 0.0
    %222 = vmatprep.subr.mxu0 0.0
    %223 = vmatpush1.msra.mxu0 0.0
    %224 = vmatprep.subr.mxu0 0.0
    %225 = vmatpush1.msra.mxu0 0.0
    %226 = vmatprep.subr.mxu0 0.0
    %227 = vmatpush1.msra.mxu0 0.0
    %228 = vmatprep.subr.mxu0 0.0
    %229 = vmatpush1.msra.mxu0 0.0
    %230 = vmatprep.subr.mxu0 0.0
    %231 = vmatpush1.msra.mxu0 0.0
    %232 = vmatprep.subr.mxu0 0.0
    %233 = vmatpush1.msra.mxu0 0.0
    %234 = vmatprep.subr.mxu0 0.0
    %235 = vmatpush1.msra.mxu0 0.0
    %236 = vmatprep.subr.mxu0 0.0
    %237 = vmatpush1.msra.mxu0 0.0
    %238 = vmatprep.subr.mxu0 0.0
    %239 = vmatpush1.msra.mxu0 0.0
    %240 = vmatprep.subr.mxu0 0.0
    %241 = vmatpush1.msra.mxu0 0.0
    %242 = vmatprep.subr.mxu0 0.0
    %243 = vmatpush1.msra.mxu0 0.0
    %244 = vmatprep.subr.mxu0 0.0
    %245 = vmatpush1.msra.mxu0 0.0
    %246 = vmatprep.subr.mxu0 0.0
    %247 = vmatpush1.msra.mxu0 0.0
    %248 = vmatprep.mubr.f32.mxu0 0.0
    %249 = vmatmul.mubr.f32.gmra.mrb[0].mxu0 %v173
    %v250 = vpop.f32.mrb[0].mxu0
    %v251 = vadd.f32 %v154, %v250
    %v252 = vpop.f32.mrb[0].mxu0
    %253 = vmatprep.mubr.f32.mxu0 0.0
    %254 = vmatmul.mubr.f32.gmra.mrb[0].mxu0 %v176
    %v255 = vpop.f32.mrb[0].mxu0
    %v256 = vadd.f32 %v159, %v255
    %v257 = vpop.f32.mrb[0].mxu0
    %258 = vmatprep.mubr.f32.mxu0 0.0
    %259 = vmatmul.mubr.f32.gmra.mrb[0].mxu0 %v179
    %v260 = vpop.f32.mrb[0].mxu0
    %v261 = vadd.f32 %v164, %v260
    %v262 = vpop.f32.mrb[0].mxu0
    %263 = vmatprep.mubr.f32.mxu0 0.0
    %264 = vmatmul.mubr.f32.gmra.mrb[0].mxu0 %v182
    %v265 = vpop.f32.mrb[0].mxu0
    %v266 = vadd.f32 %v169, %v265
    %v267 = vpop.f32.mrb[0].mxu0
    %268 = vdwg.mxu0
    %v269 = vld [vmem:[%s6] sm:$0xff]
    %v270 = vld [vmem:[%s6 + $0x8] sm:$0xff]
    %v271 = vld [vmem:[%s6 + $0x10] sm:$0xff]
    %v272 = vld [vmem:[%s6 + $0x18] sm:$0xff]
    %274 = vset.pattern.permute.xlu0 0
    %275 = vperm.xlu0 %274, %v269
    %v276 = vpop.permute.xlu0 %275
    %279 = vset.pattern.permute.xlu0 0
    %280 = vperm.xlu0 %279, %v270
    %v281 = vpop.permute.xlu0 %280
    %284 = vset.pattern.permute.xlu0 0
    %285 = vperm.xlu0 %284, %v271
    %v286 = vpop.permute.xlu0 %285
    %289 = vset.pattern.permute.xlu0 0
    %290 = vperm.xlu0 %289, %v272
    %v291 = vpop.permute.xlu0 %290
    %v293 = vadd.f32 %v251, %v276
    %v294 = vadd.f32 %v256, %v281
    %v295 = vadd.f32 %v261, %v286
    %v296 = vadd.f32 %v266, %v291
    %v297 = vmax.f32 %v293, 0.0
    %v298 = vmax.f32 %v294, 0.0
    %v299 = vmax.f32 %v295, 0.0
    %v300 = vmax.f32 %v296, 0.0
    %v301 = vld [vmem:[%s7] sm:$0x1]
    %s302 = sld [smem:[#allocation2]]
    %v303 = vstv %s302
    %vm304 = vcmask 261120
    %v306 = vsel %vm304, %v301, 0
    %308 = vmatprep.subr.mxu0 0.0
    %309 = vmatpush1.msra.mxu0 %v297
    %310 = vmatprep.subr.mxu0 0.0
    %311 = vmatpush1.msra.mxu0 %v298
    %312 = vmatprep.subr.mxu0 0.0
    %313 = vmatpush1.msra.mxu0 %v299
    %314 = vmatprep.subr.mxu0 0.0
    %315 = vmatpush1.msra.mxu0 %v300
    %316 = vmatprep.subr.mxu0 0.0
    %317 = vmatpush1.msra.mxu0 0.0
    %318 = vmatprep.subr.mxu0 0.0
    %319 = vmatpush1.msra.mxu0 0.0
    %320 = vmatprep.subr.mxu0 0.0
    %321 = vmatpush1.msra.mxu0 0.0
    %322 = vmatprep.subr.mxu0 0.0
    %323 = vmatpush1.msra.mxu0 0.0
    %324 = vmatprep.subr.mxu0 0.0
    %325 = vmatpush1.msra.mxu0 0.0
    %326 = vmatprep.subr.mxu0 0.0
    %327 = vmatpush1.msra.mxu0 0.0
    %328 = vmatprep.subr.mxu0 0.0
    %329 = vmatpush1.msra.mxu0 0.0
    %330 = vmatprep.subr.mxu0 0.0
    %331 = vmatpush1.msra.mxu0 0.0
    %332 = vmatprep.subr.mxu0 0.0
    %333 = vmatpush1.msra.mxu0 0.0
    %334 = vmatprep.subr.mxu0 0.0
    %335 = vmatpush1.msra.mxu0 0.0
    %336 = vmatprep.subr.mxu0 0.0
    %337 = vmatpush1.msra.mxu0 0.0
    %338 = vmatprep.subr.mxu0 0.0
    %339 = vmatpush1.msra.mxu0 0.0
    %340 = vmatprep.subr.mxu0 0.0
    %341 = vmatpush1.msra.mxu0 0.0
    %342 = vmatprep.subr.mxu0 0.0
    %343 = vmatpush1.msra.mxu0 0.0
    %344 = vmatprep.subr.mxu0 0.0
    %345 = vmatpush1.msra.mxu0 0.0
    %346 = vmatprep.subr.mxu0 0.0
    %347 = vmatpush1.msra.mxu0 0.0
    %348 = vmatprep.subr.mxu0 0.0
    %349 = vmatpush1.msra.mxu0 0.0
    %350 = vmatprep.subr.mxu0 0.0
    %351 = vmatpush1.msra.mxu0 0.0
    %352 = vmatprep.subr.mxu0 0.0
    %353 = vmatpush1.msra.mxu0 0.0
    %354 = vmatprep.subr.mxu0 0.0
    %355 = vmatpush1.msra.mxu0 0.0
    %356 = vmatprep.subr.mxu0 0.0
    %357 = vmatpush1.msra.mxu0 0.0
    %358 = vmatprep.subr.mxu0 0.0
    %359 = vmatpush1.msra.mxu0 0.0
    %360 = vmatprep.subr.mxu0 0.0
    %361 = vmatpush1.msra.mxu0 0.0
    %362 = vmatprep.subr.mxu0 0.0
    %363 = vmatpush1.msra.mxu0 0.0
    %364 = vmatprep.subr.mxu0 0.0
    %365 = vmatpush1.msra.mxu0 0.0
    %366 = vmatprep.subr.mxu0 0.0
    %367 = vmatpush1.msra.mxu0 0.0
    %368 = vmatprep.subr.mxu0 0.0
    %369 = vmatpush1.msra.mxu0 0.0
    %370 = vmatprep.subr.mxu0 0.0
    %371 = vmatpush1.msra.mxu0 0.0
    %372 = vmatprep.mubr.f32.mxu0 0.0
    %373 = vmatmul.mubr.f32.gmra.mrb[0].mxu0 %v306
    %v374 = vpop.f32.mrb[0].mxu0
    %v375 = vadd.f32 %v303, %v374
    %v376 = vpop.f32.mrb[0].mxu0
    %377 = vdwg.mxu0
    %378 = vst [vmem:[#allocation3] sm:$0x1] %v375
    // Predicated region
    $region38: #{tpu_custom_call.1} parent=1 // pred_check
      _
    $region39: #{tpu_custom_call.1} parent=1 // pred_check_branch
      %380 = sbr.rel (0) target = $region41
    $region40: #{tpu_custom_call.1} parent=1 // pred_region
      %s382 = ssub.s32 16, 16
      %383 = vsyncadd [#allocation4], %s382
      %s385 = sshll.u32 [#allocation3], 4
      %s386 = int_to_ptr.vmem [resolvable:$true] %s385
      %388 = dma.vmem_to_hbm [thread:$0]  %s386, 16, %s9, [#allocation4]
    $region41: #{tpu_custom_call.1} parent=1 // pred_fallthru
      _
    // Predicated region
    $region42: #{tpu_custom_call.1} parent=1 // pred_check
      _
    $region43: #{tpu_custom_call.1} parent=1 // pred_check_branch
      %390 = sbr.rel (0) target = $region45
    $region44: #{tpu_custom_call.1} parent=1 // pred_region
      %391 = dma.done [#allocation4], 16
    $region45: #{tpu_custom_call.1} parent=1 // pred_fallthru
      _
    %392 = vsyncpa [#allocation4], 1

// kernel: tpu_custom_call.1
$region0: #{tpu_custom_call.1}
  #allocation0 [shape = 'u32[]', space=smem, size = 0x4, offset = 0x4, fixed_abs, tag = 'smem constant byte address 0x4 - core index']
  #allocation1 [shape = 'u32[144,128]{1,0:T(1,128)}', space=vmem, size = 0x12000, scoped, tag = 'internal scratch']
  #allocation2 [shape = 'f32[1,1]{1,0:T(1,128)S(6)}', space=smem, size = 0x200, scoped, tag = 'scoped memory for tpu_custom_call.1']
  %s0 = inlined_call_operand.vmem [shape: f32[16,128], index: 0, kind: input, shape index: {}]
  %s1 = inlined_call_operand.vmem [shape: f32[16,128], index: 1, kind: input, shape index: {}]
  %s2 = inlined_call_operand.vmem [shape: f32[32,16], index: 2, kind: input, shape index: {}]
  %s3 = inlined_call_operand.vmem [shape: f32[32,16], index: 3, kind: input, shape index: {}]
  %s4 = inlined_call_operand.vmem [shape: f32[32,1], index: 4, kind: input, shape index: {}]
  %s5 = inlined_call_operand.vmem [shape: f32[1,32], index: 5, kind: input, shape index: {}]
  %s6 = inlined_call_operand.<no memory space> [shape: f32[1,1], index: 6, kind: input, shape index: {}]
  %s7 = inlined_call_operand.hbm [shape: f32[1,128], index: 7, kind: output, shape index: {}]
  %s8 = sld [smem:[#allocation0]]
  $region38: #{tpu_custom_call.1} parent=0
    _
  %s10 = ssub.s32 1, %s8
  %s11 = scalar_select 0, %s10, %s8
  %12 = sst [smem:[#allocation2]] %s6
  $region1: #{tpu_custom_call.1} parent=0
    #allocation3 [shape = 'u8[512]{0}', space=vmem, size = 0x400, scoped, tag = 'output window, operand 0, single buffered']
    #allocation4 [shape = 's32[1]{0}', space=sflag, size = 0x4, scoped, tag = 'scoped memory for tpu_custom_call.1']
    %13 = vsyncpa [#allocation4], 0
    // Predicated region
    $region2: #{tpu_custom_call.1} parent=1 // pred_check
      _
    $region3: #{tpu_custom_call.1} parent=1 // pred_check_branch
      %15 = sbr.rel (0) target = $region5
    $region4: #{tpu_custom_call.1} parent=1 // pred_region
      _
    $region5: #{tpu_custom_call.1} parent=1 // pred_fallthru
      _
    // Predicated region
    $region6: #{tpu_custom_call.1} parent=1 // pred_check
      _
    $region7: #{tpu_custom_call.1} parent=1 // pred_check_branch
      %17 = sbr.rel (0) target = $region9
    $region8: #{tpu_custom_call.1} parent=1 // pred_region
      _
    $region9: #{tpu_custom_call.1} parent=1 // pred_fallthru
      _
    // Predicated region
    $region10: #{tpu_custom_call.1} parent=1 // pred_check
      _
    $region11: #{tpu_custom_call.1} parent=1 // pred_check_branch
      %19 = sbr.rel (0) target = $region13
    $region12: #{tpu_custom_call.1} parent=1 // pred_region
      _
    $region13: #{tpu_custom_call.1} parent=1 // pred_fallthru
      _
    // Predicated region
    $region14: #{tpu_custom_call.1} parent=1 // pred_check
      _
    $region15: #{tpu_custom_call.1} parent=1 // pred_check_branch
      %21 = sbr.rel (0) target = $region17
    $region16: #{tpu_custom_call.1} parent=1 // pred_region
      _
    $region17: #{tpu_custom_call.1} parent=1 // pred_fallthru
      _
    // Predicated region
    $region18: #{tpu_custom_call.1} parent=1 // pred_check
      _
    $region19: #{tpu_custom_call.1} parent=1 // pred_check_branch
      %23 = sbr.rel (0) target = $region21
    $region20: #{tpu_custom_call.1} parent=1 // pred_region
      _
    $region21: #{tpu_custom_call.1} parent=1 // pred_fallthru
      _
    // Predicated region
    $region22: #{tpu_custom_call.1} parent=1 // pred_check
      _
    $region23: #{tpu_custom_call.1} parent=1 // pred_check_branch
      %25 = sbr.rel (0) target = $region25
    $region24: #{tpu_custom_call.1} parent=1 // pred_region
      _
    $region25: #{tpu_custom_call.1} parent=1 // pred_fallthru
      _
    // Predicated region
    $region26: #{tpu_custom_call.1} parent=1 // pred_check
      _
    $region27: #{tpu_custom_call.1} parent=1 // pred_check_branch
      %27 = sbr.rel (0) target = $region29
    $region28: #{tpu_custom_call.1} parent=1 // pred_region
      _
    $region29: #{tpu_custom_call.1} parent=1 // pred_fallthru
      _
    %v28 = vld [vmem:[%s2] sm:$0xff]
    %v29 = vld [vmem:[%s2 + $0x8] sm:$0xff]
    %v30 = vld [vmem:[%s2 + $0x10] sm:$0xff]
    %v31 = vld [vmem:[%s2 + $0x18] sm:$0xff]
    %v32 = vld [vmem:[%s0] sm:$0xff]
    %v33 = vld [vmem:[%s0 + $0x8] sm:$0xff]
    %v34 = vld [vmem:[%s3] sm:$0xff]
    %v35 = vld [vmem:[%s3 + $0x8] sm:$0xff]
    %v36 = vld [vmem:[%s3 + $0x10] sm:$0xff]
    %v37 = vld [vmem:[%s3 + $0x18] sm:$0xff]
    %v38 = vld [vmem:[%s1] sm:$0xff]
    %v39 = vld [vmem:[%s1 + $0x8] sm:$0xff]
    %vm40 = vcmask 130048
    %v42 = vsel %vm40, %v34, 0
    %v45 = vsel %vm40, %v35, 0
    %v48 = vsel %vm40, %v36, 0
    %v51 = vsel %vm40, %v37, 0
    %53 = vmatprep.subr.mxu0 0.0
    %54 = vmatpush1.msra.mxu0 %v38
    %55 = vmatprep.subr.mxu0 0.0
    %56 = vmatpush1.msra.mxu0 %v39
    %57 = vmatprep.subr.mxu0 0.0
    %58 = vmatpush1.msra.mxu0 0.0
    %59 = vmatprep.subr.mxu0 0.0
    %60 = vmatpush1.msra.mxu0 0.0
    %61 = vmatprep.subr.mxu0 0.0
    %62 = vmatpush1.msra.mxu0 0.0
    %63 = vmatprep.subr.mxu0 0.0
    %64 = vmatpush1.msra.mxu0 0.0
    %65 = vmatprep.subr.mxu0 0.0
    %66 = vmatpush1.msra.mxu0 0.0
    %67 = vmatprep.subr.mxu0 0.0
    %68 = vmatpush1.msra.mxu0 0.0
    %69 = vmatprep.subr.mxu0 0.0
    %70 = vmatpush1.msra.mxu0 0.0
    %71 = vmatprep.subr.mxu0 0.0
    %72 = vmatpush1.msra.mxu0 0.0
    %73 = vmatprep.subr.mxu0 0.0
    %74 = vmatpush1.msra.mxu0 0.0
    %75 = vmatprep.subr.mxu0 0.0
    %76 = vmatpush1.msra.mxu0 0.0
    %77 = vmatprep.subr.mxu0 0.0
    %78 = vmatpush1.msra.mxu0 0.0
    %79 = vmatprep.subr.mxu0 0.0
    %80 = vmatpush1.msra.mxu0 0.0
    %81 = vmatprep.subr.mxu0 0.0
    %82 = vmatpush1.msra.mxu0 0.0
    %83 = vmatprep.subr.mxu0 0.0
    %84 = vmatpush1.msra.mxu0 0.0
    %85 = vmatprep.subr.mxu0 0.0
    %86 = vmatpush1.msra.mxu0 0.0
    %87 = vmatprep.subr.mxu0 0.0
    %88 = vmatpush1.msra.mxu0 0.0
    %89 = vmatprep.subr.mxu0 0.0
    %90 = vmatpush1.msra.mxu0 0.0
    %91 = vmatprep.subr.mxu0 0.0
    %92 = vmatpush1.msra.mxu0 0.0
    %93 = vmatprep.subr.mxu0 0.0
    %94 = vmatpush1.msra.mxu0 0.0
    %95 = vmatprep.subr.mxu0 0.0
    %96 = vmatpush1.msra.mxu0 0.0
    %97 = vmatprep.subr.mxu0 0.0
    %98 = vmatpush1.msra.mxu0 0.0
    %99 = vmatprep.subr.mxu0 0.0
    %100 = vmatpush1.msra.mxu0 0.0
    %101 = vmatprep.subr.mxu0 0.0
    %102 = vmatpush1.msra.mxu0 0.0
    %103 = vmatprep.subr.mxu0 0.0
    %104 = vmatpush1.msra.mxu0 0.0
    %105 = vmatprep.subr.mxu0 0.0
    %106 = vmatpush1.msra.mxu0 0.0
    %107 = vmatprep.subr.mxu0 0.0
    %108 = vmatpush1.msra.mxu0 0.0
    %109 = vmatprep.subr.mxu0 0.0
    %110 = vmatpush1.msra.mxu0 0.0
    %111 = vmatprep.subr.mxu0 0.0
    %112 = vmatpush1.msra.mxu0 0.0
    %113 = vmatprep.subr.mxu0 0.0
    %114 = vmatpush1.msra.mxu0 0.0
    %115 = vmatprep.subr.mxu0 0.0
    %116 = vmatpush1.msra.mxu0 0.0
    %117 = vmatprep.mubr.f32.mxu0 0.0
    %118 = vmatmul.mubr.f32.gmra.mrb[0].mxu0 %v42
    %v119 = vpop.f32.mrb[0].mxu0
    %v120 = vadd.f32 0.0, %v119
    %v121 = vpop.f32.mrb[0].mxu0
    %122 = vmatprep.mubr.f32.mxu0 0.0
    %123 = vmatmul.mubr.f32.gmra.mrb[0].mxu0 %v45
    %v124 = vpop.f32.mrb[0].mxu0
    %v125 = vadd.f32 0.0, %v124
    %v126 = vpop.f32.mrb[0].mxu0
    %127 = vmatprep.mubr.f32.mxu0 0.0
    %128 = vmatmul.mubr.f32.gmra.mrb[0].mxu0 %v48
    %v129 = vpop.f32.mrb[0].mxu0
    %v130 = vadd.f32 0.0, %v129
    %v131 = vpop.f32.mrb[0].mxu0
    %132 = vmatprep.mubr.f32.mxu0 0.0
    %133 = vmatmul.mubr.f32.gmra.mrb[0].mxu0 %v51
    %v134 = vpop.f32.mrb[0].mxu0
    %v135 = vadd.f32 0.0, %v134
    %v136 = vpop.f32.mrb[0].mxu0
    %137 = vdwg.mxu0
    %v139 = vsel %vm40, %v28, 0
    %v142 = vsel %vm40, %v29, 0
    %v145 = vsel %vm40, %v30, 0
    %v148 = vsel %vm40, %v31, 0
    %150 = vmatprep.subr.mxu0 0.0
    %151 = vmatpush1.msra.mxu0 %v32
    %152 = vmatprep.subr.mxu0 0.0
    %153 = vmatpush1.msra.mxu0 %v33
    %154 = vmatprep.subr.mxu0 0.0
    %155 = vmatpush1.msra.mxu0 0.0
    %156 = vmatprep.subr.mxu0 0.0
    %157 = vmatpush1.msra.mxu0 0.0
    %158 = vmatprep.subr.mxu0 0.0
    %159 = vmatpush1.msra.mxu0 0.0
    %160 = vmatprep.subr.mxu0 0.0
    %161 = vmatpush1.msra.mxu0 0.0
    %162 = vmatprep.subr.mxu0 0.0
    %163 = vmatpush1.msra.mxu0 0.0
    %164 = vmatprep.subr.mxu0 0.0
    %165 = vmatpush1.msra.mxu0 0.0
    %166 = vmatprep.subr.mxu0 0.0
    %167 = vmatpush1.msra.mxu0 0.0
    %168 = vmatprep.subr.mxu0 0.0
    %169 = vmatpush1.msra.mxu0 0.0
    %170 = vmatprep.subr.mxu0 0.0
    %171 = vmatpush1.msra.mxu0 0.0
    %172 = vmatprep.subr.mxu0 0.0
    %173 = vmatpush1.msra.mxu0 0.0
    %174 = vmatprep.subr.mxu0 0.0
    %175 = vmatpush1.msra.mxu0 0.0
    %176 = vmatprep.subr.mxu0 0.0
    %177 = vmatpush1.msra.mxu0 0.0
    %178 = vmatprep.subr.mxu0 0.0
    %179 = vmatpush1.msra.mxu0 0.0
    %180 = vmatprep.subr.mxu0 0.0
    %181 = vmatpush1.msra.mxu0 0.0
    %182 = vmatprep.subr.mxu0 0.0
    %183 = vmatpush1.msra.mxu0 0.0
    %184 = vmatprep.subr.mxu0 0.0
    %185 = vmatpush1.msra.mxu0 0.0
    %186 = vmatprep.subr.mxu0 0.0
    %187 = vmatpush1.msra.mxu0 0.0
    %188 = vmatprep.subr.mxu0 0.0
    %189 = vmatpush1.msra.mxu0 0.0
    %190 = vmatprep.subr.mxu0 0.0
    %191 = vmatpush1.msra.mxu0 0.0
    %192 = vmatprep.subr.mxu0 0.0
    %193 = vmatpush1.msra.mxu0 0.0
    %194 = vmatprep.subr.mxu0 0.0
    %195 = vmatpush1.msra.mxu0 0.0
    %196 = vmatprep.subr.mxu0 0.0
    %197 = vmatpush1.msra.mxu0 0.0
    %198 = vmatprep.subr.mxu0 0.0
    %199 = vmatpush1.msra.mxu0 0.0
    %200 = vmatprep.subr.mxu0 0.0
    %201 = vmatpush1.msra.mxu0 0.0
    %202 = vmatprep.subr.mxu0 0.0
    %203 = vmatpush1.msra.mxu0 0.0
    %204 = vmatprep.subr.mxu0 0.0
    %205 = vmatpush1.msra.mxu0 0.0
    %206 = vmatprep.subr.mxu0 0.0
    %207 = vmatpush1.msra.mxu0 0.0
    %208 = vmatprep.subr.mxu0 0.0
    %209 = vmatpush1.msra.mxu0 0.0
    %210 = vmatprep.subr.mxu0 0.0
    %211 = vmatpush1.msra.mxu0 0.0
    %212 = vmatprep.subr.mxu0 0.0
    %213 = vmatpush1.msra.mxu0 0.0
    %214 = vmatprep.mubr.f32.mxu0 0.0
    %215 = vmatmul.mubr.f32.gmra.mrb[0].mxu0 %v139
    %v216 = vpop.f32.mrb[0].mxu0
    %v217 = vadd.f32 %v120, %v216
    %v218 = vpop.f32.mrb[0].mxu0
    %219 = vmatprep.mubr.f32.mxu0 0.0
    %220 = vmatmul.mubr.f32.gmra.mrb[0].mxu0 %v142
    %v221 = vpop.f32.mrb[0].mxu0
    %v222 = vadd.f32 %v125, %v221
    %v223 = vpop.f32.mrb[0].mxu0
    %224 = vmatprep.mubr.f32.mxu0 0.0
    %225 = vmatmul.mubr.f32.gmra.mrb[0].mxu0 %v145
    %v226 = vpop.f32.mrb[0].mxu0
    %v227 = vadd.f32 %v130, %v226
    %v228 = vpop.f32.mrb[0].mxu0
    %229 = vmatprep.mubr.f32.mxu0 0.0
    %230 = vmatmul.mubr.f32.gmra.mrb[0].mxu0 %v148
    %v231 = vpop.f32.mrb[0].mxu0
    %v232 = vadd.f32 %v135, %v231
    %v233 = vpop.f32.mrb[0].mxu0
    %234 = vdwg.mxu0
    %v235 = vld [vmem:[%s4] sm:$0xff]
    %v236 = vld [vmem:[%s4 + $0x8] sm:$0xff]
    %v237 = vld [vmem:[%s4 + $0x10] sm:$0xff]
    %v238 = vld [vmem:[%s4 + $0x18] sm:$0xff]
    %240 = vset.pattern.permute.xlu0 0
    %241 = vperm.xlu0 %240, %v235
    %v242 = vpop.permute.xlu0 %241
    %245 = vset.pattern.permute.xlu0 0
    %246 = vperm.xlu0 %245, %v236
    %v247 = vpop.permute.xlu0 %246
    %250 = vset.pattern.permute.xlu0 0
    %251 = vperm.xlu0 %250, %v237
    %v252 = vpop.permute.xlu0 %251
    %255 = vset.pattern.permute.xlu0 0
    %256 = vperm.xlu0 %255, %v238
    %v257 = vpop.permute.xlu0 %256
    %v259 = vadd.f32 %v217, %v242
    %v260 = vadd.f32 %v222, %v247
    %v261 = vadd.f32 %v227, %v252
    %v262 = vadd.f32 %v232, %v257
    %v263 = vmax.f32 %v259, 0.0
    %v264 = vmax.f32 %v260, 0.0
    %v265 = vmax.f32 %v261, 0.0
    %v266 = vmax.f32 %v262, 0.0
    %v267 = vld [vmem:[%s5] sm:$0x1]
    %s268 = sld [smem:[#allocation2]]
    %v269 = vstv %s268
    %vm270 = vcmask 261120
    %v272 = vsel %vm270, %v267, 0
    %274 = vmatprep.subr.mxu0 0.0
    %275 = vmatpush1.msra.mxu0 %v263
    %276 = vmatprep.subr.mxu0 0.0
    %277 = vmatpush1.msra.mxu0 %v264
    %278 = vmatprep.subr.mxu0 0.0
    %279 = vmatpush1.msra.mxu0 %v265
    %280 = vmatprep.subr.mxu0 0.0
    %281 = vmatpush1.msra.mxu0 %v266
    %282 = vmatprep.subr.mxu0 0.0
    %283 = vmatpush1.msra.mxu0 0.0
    %284 = vmatprep.subr.mxu0 0.0
    %285 = vmatpush1.msra.mxu0 0.0
    %286 = vmatprep.subr.mxu0 0.0
    %287 = vmatpush1.msra.mxu0 0.0
    %288 = vmatprep.subr.mxu0 0.0
    %289 = vmatpush1.msra.mxu0 0.0
    %290 = vmatprep.subr.mxu0 0.0
    %291 = vmatpush1.msra.mxu0 0.0
    %292 = vmatprep.subr.mxu0 0.0
    %293 = vmatpush1.msra.mxu0 0.0
    %294 = vmatprep.subr.mxu0 0.0
    %295 = vmatpush1.msra.mxu0 0.0
    %296 = vmatprep.subr.mxu0 0.0
    %297 = vmatpush1.msra.mxu0 0.0
    %298 = vmatprep.subr.mxu0 0.0
    %299 = vmatpush1.msra.mxu0 0.0
    %300 = vmatprep.subr.mxu0 0.0
    %301 = vmatpush1.msra.mxu0 0.0
    %302 = vmatprep.subr.mxu0 0.0
    %303 = vmatpush1.msra.mxu0 0.0
    %304 = vmatprep.subr.mxu0 0.0
    %305 = vmatpush1.msra.mxu0 0.0
    %306 = vmatprep.subr.mxu0 0.0
    %307 = vmatpush1.msra.mxu0 0.0
    %308 = vmatprep.subr.mxu0 0.0
    %309 = vmatpush1.msra.mxu0 0.0
    %310 = vmatprep.subr.mxu0 0.0
    %311 = vmatpush1.msra.mxu0 0.0
    %312 = vmatprep.subr.mxu0 0.0
    %313 = vmatpush1.msra.mxu0 0.0
    %314 = vmatprep.subr.mxu0 0.0
    %315 = vmatpush1.msra.mxu0 0.0
    %316 = vmatprep.subr.mxu0 0.0
    %317 = vmatpush1.msra.mxu0 0.0
    %318 = vmatprep.subr.mxu0 0.0
    %319 = vmatpush1.msra.mxu0 0.0
    %320 = vmatprep.subr.mxu0 0.0
    %321 = vmatpush1.msra.mxu0 0.0
    %322 = vmatprep.subr.mxu0 0.0
    %323 = vmatpush1.msra.mxu0 0.0
    %324 = vmatprep.subr.mxu0 0.0
    %325 = vmatpush1.msra.mxu0 0.0
    %326 = vmatprep.subr.mxu0 0.0
    %327 = vmatpush1.msra.mxu0 0.0
    %328 = vmatprep.subr.mxu0 0.0
    %329 = vmatpush1.msra.mxu0 0.0
    %330 = vmatprep.subr.mxu0 0.0
    %331 = vmatpush1.msra.mxu0 0.0
    %332 = vmatprep.subr.mxu0 0.0
    %333 = vmatpush1.msra.mxu0 0.0
    %334 = vmatprep.subr.mxu0 0.0
    %335 = vmatpush1.msra.mxu0 0.0
    %336 = vmatprep.subr.mxu0 0.0
    %337 = vmatpush1.msra.mxu0 0.0
    %338 = vmatprep.mubr.f32.mxu0 0.0
    %339 = vmatmul.mubr.f32.gmra.mrb[0].mxu0 %v272
    %v340 = vpop.f32.mrb[0].mxu0
    %v341 = vadd.f32 %v269, %v340
    %v342 = vpop.f32.mrb[0].mxu0
    %343 = vdwg.mxu0
    %344 = vst [vmem:[#allocation3] sm:$0x1] %v341
    // Predicated region
    $region30: #{tpu_custom_call.1} parent=1 // pred_check
      _
    $region31: #{tpu_custom_call.1} parent=1 // pred_check_branch
      %346 = sbr.rel (0) target = $region33
    $region32: #{tpu_custom_call.1} parent=1 // pred_region
      %s348 = ssub.s32 16, 16
      %349 = vsyncadd [#allocation4], %s348
      %s351 = sshll.u32 [#allocation3], 4
      %s352 = int_to_ptr.vmem [resolvable:$true] %s351
      %354 = dma.vmem_to_hbm [thread:$0]  %s352, 16, %s7, [#allocation4]
    $region33: #{tpu_custom_call.1} parent=1 // pred_fallthru
      _
    // Predicated region
    $region34: #{tpu_custom_call.1} parent=1 // pred_check
      _
    $region35: #{tpu_custom_call.1} parent=1 // pred_check_branch
      %356 = sbr.rel (0) target = $region37
    $region36: #{tpu_custom_call.1} parent=1 // pred_region
      %357 = dma.done [#allocation4], 16
    $region37: #{tpu_custom_call.1} parent=1 // pred_fallthru
      _
    %358 = vsyncpa [#allocation4], 1

</llo_original>
